<compile_context>
chip_gen: v5e
topology: v5e:2x2
jax: 0.10.0
libtpu: 0.0.40
codegen_flags: <defaults>
</compile_context>

<pallas_src>
import jax
import jax.numpy as jnp
from jax.experimental import pallas as pl
from jax.experimental.pallas import tpu as pltpu

BN_EPS = 1e-5


# ----------------------------------------------------------------------------
# Kernel: one full MLP forward on a (B, D) batch resident in VMEM.
# ----------------------------------------------------------------------------
def mlp_kernel(x_ref, w1_ref, g_ref, beta_ref, w2_ref, b2_ref, o_ref):
    # ---- Linear 1: (B, D) @ (D, H), bf16 operands, f32 accumulation ----
    # b1 intentionally omitted: cancelled exactly by train-mode BatchNorm.
    x = x_ref[...].astype(jnp.bfloat16)
    h = jnp.dot(x, w1_ref[...], preferred_element_type=jnp.float32)   # (B, H) f32

    # ---- BatchNorm1d (training forward, biased batch variance), f32 ----
    # Folded to per-feature scale/shift: only mul+add per element on (B, H).
    # Kept in f32 (v5e has no bf16 VPU/EUP; rsqrt goes to the EUP slot).
    mean = jnp.mean(h, axis=0, keepdims=True)                          # (1, H)
    centered = h - mean
    var = jnp.mean(centered * centered, axis=0, keepdims=True)         # biased var
    scale = g_ref[...] * jax.lax.rsqrt(var + BN_EPS)                   # (1, H)
    shift = beta_ref[...] - mean * scale                               # (1, H)

    # ---- ReLU, cast once to bf16 for the second MXU pass ----
    r = jnp.maximum(h * scale + shift, 0.0).astype(jnp.bfloat16)       # (B, H)

    # ---- Linear 2: (B, H) @ (H, P_pad) + (1, P_pad), lane-dense store ----
    o_ref[...] = (jnp.dot(r, w2_ref[...], preferred_element_type=jnp.float32)
                  + b2_ref[...]).astype(o_ref.dtype)


# ----------------------------------------------------------------------------
# One-time parameter preparation (hoisted out of the per-call path).
# ----------------------------------------------------------------------------
def prepare_mlp_params(w1, b1, gamma, beta, w2, b2):
    """Pad + cast weights ONCE (parameter-creation time), not per forward.

    b1 is accepted for API parity with the PyTorch module but is dropped:
    train-mode BatchNorm right after Linear-1 cancels it exactly.
    """
    del b1  # exact cancellation under train-mode BN
    D, H = w1.shape
    P = w2.shape[1]

    # Lane-dense output: pad projection dim to a multiple of 128 so the
    # output block stores as unmasked vst; the wrapper slices padding off.
    P_pad = ((P + 127) // 128) * 128
    if P_pad != P:
        w2 = jnp.pad(w2, ((0, 0), (0, P_pad - P)))
        b2 = jnp.pad(b2, ((0, 0), (0, P_pad - P)))

    return dict(
        w1=w1.astype(jnp.bfloat16),          # bf16 at rest: half the weight DMA
        gamma=gamma.astype(jnp.float32).reshape(1, H),
        beta=beta.astype(jnp.float32).reshape(1, H),
        w2=w2.astype(jnp.bfloat16),
        b2=b2.astype(jnp.float32).reshape(1, P_pad),
        D=D, H=H, P=P, P_pad=P_pad,
    )


def _vmem_limit_bytes(B, D, H, P_pad, groups=1):
    # Footprint of one grid step (double-buffered inputs/outputs) + headroom.
    step = (B * D * 4 + D * H * 2 + 2 * H * 4 + H * P_pad * 2
            + P_pad * 4 + B * P_pad * 4)
    limit = 2 * step + (4 << 20)
    return min(max(limit, 4 << 20), 64 << 20)


def _cost(B, D, H, P_pad, groups=1):
    bytes_one = (B * D * 4 + B * P_pad * 4)
    bytes_w = D * H * 2 + 2 * H * 4 + H * P_pad * 2 + P_pad * 4
    return pl.CostEstimate(
        flops=groups * (2 * B * D * H + 2 * B * H * P_pad),
        transcendentals=groups * H,                      # rsqrt over hidden feats
        bytes_accessed=groups * bytes_one + bytes_w,     # weights resident across grid
    )


# ----------------------------------------------------------------------------
# Forward: single BN batch, grid-less call (everything fits in VMEM).
# ----------------------------------------------------------------------------
def mlp_forward(x, params):
    B, D = x.shape
    H, P, P_pad = params["H"], params["P"], params["P_pad"]
    assert D == params["D"]

    full = lambda shape: pl.BlockSpec(shape, lambda: tuple(0 for _ in shape))

    out = pl.pallas_call(
        mlp_kernel,
        out_shape=jax.ShapeDtypeStruct((B, P_pad), jnp.float32),
        in_specs=[
            full((B, D)),        # x
            full((D, H)),        # w1 (bf16)
            full((1, H)),        # gamma
            full((1, H)),        # beta
            full((H, P_pad)),    # w2 (bf16, lane-padded)
            full((1, P_pad)),    # b2 (lane-padded)
        ],
        out_specs=full((B, P_pad)),
        compiler_params=pltpu.CompilerParams(
            vmem_limit_bytes=_vmem_limit_bytes(B, D, H, P_pad)),
        cost_estimate=_cost(B, D, H, P_pad),
    )(x, params["w1"], params["gamma"], params["beta"],
      params["w2"], params["b2"])

    return out[:, :P]


# ----------------------------------------------------------------------------
# Forward: G independent batches (independent BN groups) in ONE gridded call.
# Leading "parallel" grid axis -> launch overhead amortized, weights resident,
# and v7x's second TensorCore takes half the groups.
# ----------------------------------------------------------------------------
def mlp_forward_grouped(x, params):
    G, B, D = x.shape
    H, P, P_pad = params["H"], params["P"], params["P_pad"]
    assert D == params["D"]

    out = pl.pallas_call(
        mlp_kernel,
        out_shape=jax.ShapeDtypeStruct((G, B, P_pad), jnp.float32),
        grid=(G,),
        in_specs=[
            # x: one group per grid step (leading dim squeezed -> kernel sees (B, D))
            pl.BlockSpec((None, B, D), lambda g: (g, 0, 0)),
            # Weights/affine params: same block every step -> DMA'd once, resident.
            pl.BlockSpec((D, H), lambda g: (0, 0)),
            pl.BlockSpec((1, H), lambda g: (0, 0)),
            pl.BlockSpec((1, H), lambda g: (0, 0)),
            pl.BlockSpec((H, P_pad), lambda g: (0, 0)),
            pl.BlockSpec((1, P_pad), lambda g: (0, 0)),
        ],
        out_specs=pl.BlockSpec((None, B, P_pad), lambda g: (g, 0, 0)),
        compiler_params=pltpu.CompilerParams(
            dimension_semantics=("parallel",),
            vmem_limit_bytes=_vmem_limit_bytes(B, D, H, P_pad, groups=2)),
        cost_estimate=_cost(B, D, H, P_pad, groups=G),
    )(x, params["w1"], params["gamma"], params["beta"],
      params["w2"], params["b2"])

    return out[:, :, :P]


# ----------------------------------------------------------------------------
# Pure f32 reference matching PyTorch's training-mode forward (with b1).
# ----------------------------------------------------------------------------
def reference_mlp(x, w1, b1, gamma, beta, w2, b2):
    h = x @ w1 + b1
    mean = jnp.mean(h, axis=0, keepdims=True)
    var = jnp.mean((h - mean) ** 2, axis=0, keepdims=True)
    h = (h - mean) * jax.lax.rsqrt(var + BN_EPS) * gamma + beta
    h = jnp.maximum(h, 0.0)
    return h @ w2 + b2


if __name__ == "__main__":
    # Small deterministic shapes consistent with MLP(dim, projection_size,
    # hidden_size).  B=128 feeds the MXU with full rows (B should grow before
    # H); the grouped test uses 4 independent BN batches of 8 rows each.
    B, DIM, HIDDEN, PROJ = 128, 32, 128, 32
    G, GB = 4, 8

    key = jax.random.PRNGKey(0)
    kx, kxg, kw1, kb1, kw2, kb2 = jax.random.split(key, 6)

    x = jax.random.normal(kx, (B, DIM), dtype=jnp.float32)
    xg = jax.random.normal(kxg, (G, GB, DIM), dtype=jnp.float32)

    # PyTorch-style Linear init: U(-1/sqrt(fan_in), 1/sqrt(fan_in)), stored (in, out)
    lim1 = 1.0 / (DIM ** 0.5)
    w1 = jax.random.uniform(kw1, (DIM, HIDDEN), jnp.float32, -lim1, lim1)
    b1 = jax.random.uniform(kb1, (1, HIDDEN), jnp.float32, -lim1, lim1)

    lim2 = 1.0 / (HIDDEN ** 0.5)
    w2 = jax.random.uniform(kw2, (HIDDEN, PROJ), jnp.float32, -lim2, lim2)
    b2 = jax.random.uniform(kb2, (1, PROJ), jnp.float32, -lim2, lim2)

    # BatchNorm1d affine params (default init: gamma=1, beta=0)
    gamma = jnp.ones((1, HIDDEN), jnp.float32)
    beta = jnp.zeros((1, HIDDEN), jnp.float32)

    # One-time weight prep (pad + bf16) -- NOT in the per-call path.
    params = jax.block_until_ready(
        prepare_mlp_params(w1, b1, gamma, beta, w2, b2))

    # --- single-batch forward ---
    out = jax.block_until_ready(mlp_forward(x, params))
    ref = reference_mlp(x, w1, b1, gamma, beta, w2, b2)
    assert out.shape == (B, PROJ)
    # bf16 MXU operands (f32 accumulation) vs pure-f32 reference.
    assert jnp.allclose(out, ref, atol=3e-2, rtol=3e-2)

    # --- grouped forward: G independent BN batches in one gridded call ---
    outg = jax.block_until_ready(mlp_forward_grouped(xg, params))
    refg = jnp.stack([reference_mlp(xg[g], w1, b1, gamma, beta, w2, b2)
                      for g in range(G)])
    assert outg.shape == (G, GB, PROJ)
    assert jnp.allclose(outg, refg, atol=3e-2, rtol=3e-2)

    print("KERNEL_OK")
</pallas_src>

<mosaic_0001>
module attributes {stable_mosaic.version = 11 : i64} {
  func.func @mlp_kernel(%arg0: memref<128x32xf32, #tpu.memory_space<vmem>>, %arg1: memref<32x128xbf16, #tpu.memory_space<vmem>>, %arg2: memref<1x128xf32, #tpu.memory_space<vmem>>, %arg3: memref<1x128xf32, #tpu.memory_space<vmem>>, %arg4: memref<128x128xbf16, #tpu.memory_space<vmem>>, %arg5: memref<1x128xf32, #tpu.memory_space<vmem>>, %arg6: memref<128x128xf32, #tpu.memory_space<vmem>>) attributes {dimension_semantics = [], scalar_prefetch = 0 : i64, scratch_operands = 0 : i64, tpu.core_type = #tpu.core_type<tc>} {
    %c0 = arith.constant 0 : index
    %c0_0 = arith.constant 0 : index
    %0 = vector.load %arg0[%c0, %c0_0] : memref<128x32xf32, #tpu.memory_space<vmem>>, vector<128x32xf32>
    %1 = arith.truncf %0 : vector<128x32xf32> to vector<128x32xbf16>
    %c0_1 = arith.constant 0 : index
    %c0_2 = arith.constant 0 : index
    %2 = vector.load %arg1[%c0_1, %c0_2] : memref<32x128xbf16, #tpu.memory_space<vmem>>, vector<32x128xbf16>
    %cst = arith.constant dense<0.000000e+00> : vector<128x128xf32>
    %3 = tpu.matmul %1, %2, %cst {dimension_numbers = #tpu.dot_dimension_numbers<[1], [0], [0], [1], [0, 0, 1, 1], [], []>} : vector<128x32xbf16>, vector<32x128xbf16>, vector<128x128xf32> -> vector<128x128xf32>
    %cst_3 = arith.constant dense<0.000000e+00> : vector<128xf32>
    %4 = vector.multi_reduction <add>, %3, %cst_3 [0] : vector<128x128xf32> to vector<128xf32>
    %5 = vector.shape_cast %4 : vector<128xf32> to vector<1x128xf32>
    %cst_4 = arith.constant 1.280000e+02 : f32
    %6 = vector.broadcast %cst_4 : f32 to vector<1x128xf32>
    %7 = arith.divf %5, %6 : vector<1x128xf32>
    %8 = vector.broadcast %7 : vector<1x128xf32> to vector<128x128xf32>
    %9 = arith.subf %3, %8 : vector<128x128xf32>
    %10 = arith.mulf %9, %9 : vector<128x128xf32>
    %cst_5 = arith.constant dense<0.000000e+00> : vector<128xf32>
    %11 = vector.multi_reduction <add>, %10, %cst_5 [0] : vector<128x128xf32> to vector<128xf32>
    %12 = vector.shape_cast %11 : vector<128xf32> to vector<1x128xf32>
    %cst_6 = arith.constant 1.280000e+02 : f32
    %13 = vector.broadcast %cst_6 : f32 to vector<1x128xf32>
    %14 = arith.divf %12, %13 : vector<1x128xf32>
    %c0_7 = arith.constant 0 : index
    %c0_8 = arith.constant 0 : index
    %15 = vector.load %arg2[%c0_7, %c0_8] : memref<1x128xf32, #tpu.memory_space<vmem>>, vector<1x128xf32>
    %cst_9 = arith.constant 9.99999974E-6 : f32
    %16 = vector.broadcast %cst_9 : f32 to vector<1x128xf32>
    %17 = arith.addf %14, %16 : vector<1x128xf32>
    %18 = math.rsqrt %17 : vector<1x128xf32>
    %19 = arith.mulf %15, %18 : vector<1x128xf32>
    %c0_10 = arith.constant 0 : index
    %c0_11 = arith.constant 0 : index
    %20 = vector.load %arg3[%c0_10, %c0_11] : memref<1x128xf32, #tpu.memory_space<vmem>>, vector<1x128xf32>
    %21 = arith.mulf %7, %19 : vector<1x128xf32>
    %22 = arith.subf %20, %21 : vector<1x128xf32>
    %23 = vector.broadcast %19 : vector<1x128xf32> to vector<128x128xf32>
    %24 = arith.mulf %3, %23 : vector<128x128xf32>
    %25 = vector.broadcast %22 : vector<1x128xf32> to vector<128x128xf32>
    %26 = arith.addf %24, %25 : vector<128x128xf32>
    %cst_12 = arith.constant 0.000000e+00 : f32
    %27 = vector.broadcast %cst_12 : f32 to vector<128x128xf32>
    %28 = arith.maximumf %26, %27 : vector<128x128xf32>
    %29 = arith.truncf %28 : vector<128x128xf32> to vector<128x128xbf16>
    %c0_13 = arith.constant 0 : index
    %c0_14 = arith.constant 0 : index
    %30 = vector.load %arg4[%c0_13, %c0_14] : memref<128x128xbf16, #tpu.memory_space<vmem>>, vector<128x128xbf16>
    %cst_15 = arith.constant dense<0.000000e+00> : vector<128x128xf32>
    %31 = tpu.matmul %29, %30, %cst_15 {dimension_numbers = #tpu.dot_dimension_numbers<[1], [0], [0], [1], [0, 0, 1, 1], [], []>} : vector<128x128xbf16>, vector<128x128xbf16>, vector<128x128xf32> -> vector<128x128xf32>
    %c0_16 = arith.constant 0 : index
    %c0_17 = arith.constant 0 : index
    %32 = vector.load %arg5[%c0_16, %c0_17] : memref<1x128xf32, #tpu.memory_space<vmem>>, vector<1x128xf32>
    %33 = vector.broadcast %32 : vector<1x128xf32> to vector<128x128xf32>
    %34 = arith.addf %31, %33 : vector<128x128xf32>
    %c0_18 = arith.constant 0 : index
    %c0_19 = arith.constant 0 : index
    %35 = vector.load %arg6[%c0_18, %c0_19] : memref<128x128xf32, #tpu.memory_space<vmem>>, vector<128x128xf32>
    tpu.vector_store %arg6[%c0_18, %c0_19], %34 {strides = array<i32>} : memref<128x128xf32, #tpu.memory_space<vmem>>, vector<128x128xf32>,
    return
  }
}

</mosaic_0001>

<llo_original>
// kernel: tpu_custom_call.1
$region0: #{tpu_custom_call.1}
  #allocation0 [shape = 'u32[]', space=smem, size = 0x4, offset = 0x4, fixed_abs, tag = 'smem constant byte address 0x4 - core index']
  #allocation1 [shape = 'u32[72,128]{1,0:T(1,128)}', space=vmem, size = 0x9000, scoped, tag = 'internal scratch']
  %s0 = inlined_call_operand.vmem [shape: f32[128,32], index: 0, kind: input, shape index: {}]
  %s1 = inlined_call_operand.vmem [shape: bf16[32,128], index: 1, kind: input, shape index: {}]
  %s2 = inlined_call_operand.vmem [shape: f32[1,128], index: 2, kind: input, shape index: {}]
  %s3 = inlined_call_operand.vmem [shape: f32[1,128], index: 3, kind: input, shape index: {}]
  %s4 = inlined_call_operand.vmem [shape: bf16[128,128], index: 4, kind: input, shape index: {}]
  %s5 = inlined_call_operand.vmem [shape: f32[1,128], index: 5, kind: input, shape index: {}]
  %s6 = inlined_call_operand.hbm [shape: f32[128,128], index: 6, kind: output, shape index: {}]
  %s7 = sld [smem:[#allocation0]]
  $region34: #{tpu_custom_call.1} parent=0
    _
  %s9 = ssub.s32 1, %s7
  %s10 = scalar_select 0, %s9, %s7
  $region1: #{tpu_custom_call.1} parent=0
    #allocation2 [shape = 'u8[65536]{0}', space=vmem, size = 0x10000, scoped, tag = 'output window, operand 0, single buffered']
    #allocation3 [shape = 's32[1]{0}', space=sflag, size = 0x4, scoped, tag = 'scoped memory for tpu_custom_call.1']
    %11 = vsyncpa [#allocation3], 0
    // Predicated region
    $region2: #{tpu_custom_call.1} parent=1 // pred_check
      _
    $region3: #{tpu_custom_call.1} parent=1 // pred_check_branch
      %13 = sbr.rel (0) target = $region5
    $region4: #{tpu_custom_call.1} parent=1 // pred_region
      _
    $region5: #{tpu_custom_call.1} parent=1 // pred_fallthru
      _
    // Predicated region
    $region6: #{tpu_custom_call.1} parent=1 // pred_check
      _
    $region7: #{tpu_custom_call.1} parent=1 // pred_check_branch
      %15 = sbr.rel (0) target = $region9
    $region8: #{tpu_custom_call.1} parent=1 // pred_region
      _
    $region9: #{tpu_custom_call.1} parent=1 // pred_fallthru
      _
    // Predicated region
    $region10: #{tpu_custom_call.1} parent=1 // pred_check
      _
    $region11: #{tpu_custom_call.1} parent=1 // pred_check_branch
      %17 = sbr.rel (0) target = $region13
    $region12: #{tpu_custom_call.1} parent=1 // pred_region
      _
    $region13: #{tpu_custom_call.1} parent=1 // pred_fallthru
      _
    // Predicated region
    $region14: #{tpu_custom_call.1} parent=1 // pred_check
      _
    $region15: #{tpu_custom_call.1} parent=1 // pred_check_branch
      %19 = sbr.rel (0) target = $region17
    $region16: #{tpu_custom_call.1} parent=1 // pred_region
      _
    $region17: #{tpu_custom_call.1} parent=1 // pred_fallthru
      _
    // Predicated region
    $region18: #{tpu_custom_call.1} parent=1 // pred_check
      _
    $region19: #{tpu_custom_call.1} parent=1 // pred_check_branch
      %21 = sbr.rel (0) target = $region21
    $region20: #{tpu_custom_call.1} parent=1 // pred_region
      _
    $region21: #{tpu_custom_call.1} parent=1 // pred_fallthru
      _
    // Predicated region
    $region22: #{tpu_custom_call.1} parent=1 // pred_check
      _
    $region23: #{tpu_custom_call.1} parent=1 // pred_check_branch
      %23 = sbr.rel (0) target = $region25
    $region24: #{tpu_custom_call.1} parent=1 // pred_region
      _
    $region25: #{tpu_custom_call.1} parent=1 // pred_fallthru
      _
    %v25 = vld [vmem:[%s0] sm:$0xff]
    %v26 = vld [vmem:[%s0 + $0x8] sm:$0xff]
    %v27 = vld [vmem:[%s0 + $0x10] sm:$0xff]
    %v28 = vld [vmem:[%s0 + $0x18] sm:$0xff]
    %v29 = vld [vmem:[%s0 + $0x20] sm:$0xff]
    %v30 = vld [vmem:[%s0 + $0x28] sm:$0xff]
    %v31 = vld [vmem:[%s0 + $0x30] sm:$0xff]
    %v32 = vld [vmem:[%s0 + $0x38] sm:$0xff]
    %v33 = vld [vmem:[%s0 + $0x40] sm:$0xff]
    %v34 = vld [vmem:[%s0 + $0x48] sm:$0xff]
    %v35 = vld [vmem:[%s0 + $0x50] sm:$0xff]
    %v36 = vld [vmem:[%s0 + $0x58] sm:$0xff]
    %v37 = vld [vmem:[%s0 + $0x60] sm:$0xff]
    %v38 = vld [vmem:[%s0 + $0x68] sm:$0xff]
    %v39 = vld [vmem:[%s0 + $0x70] sm:$0xff]
    %v40 = vld [vmem:[%s0 + $0x78] sm:$0xff]
    %v41 = vpack.c.bf16 %v26, %v25
    %v42 = vpack.c.bf16 %v28, %v27
    %v43 = vpack.c.bf16 %v30, %v29
    %v44 = vpack.c.bf16 %v32, %v31
    %v45 = vpack.c.bf16 %v34, %v33
    %v46 = vpack.c.bf16 %v36, %v35
    %v47 = vpack.c.bf16 %v38, %v37
    %v48 = vpack.c.bf16 %v40, %v39
    %v49 = vld [vmem:[%s1] sm:$0xf]
    %v50 = vld [vmem:[%s1 + $0x4] sm:$0xf]
    %v51 = vld [vmem:[%s1 + $0x8] sm:$0xf]
    %v52 = vld [vmem:[%s1 + $0xc] sm:$0xf]
    %v57 = vunpack.c.l.b16 %v49
    %v58 = vunpack.c.l.b16 %v50
    %v59 = vunpack.c.l.b16 %v51
    %v60 = vunpack.c.l.b16 %v52
    %v61 = vpack.c.b16 %v58, %v57
    %v62 = vpack.c.b16 %v60, %v59
    %vm65 = vcmask 261120
    %v67 = vsel %vm65, %v41, 0
    %v70 = vsel %vm65, %v42, 0
    %v73 = vsel %vm65, %v43, 0
    %v76 = vsel %vm65, %v44, 0
    %v79 = vsel %vm65, %v45, 0
    %v82 = vsel %vm65, %v46, 0
    %v85 = vsel %vm65, %v47, 0
    %v88 = vsel %vm65, %v48, 0
    %90 = vmatpush.bf16.msra.mxu0 0
    %91 = vmatpush.bf16.msra.mxu0 0
    %92 = vmatpush.bf16.msra.mxu0 0
    %93 = vmatpush.bf16.msra.mxu0 0
    %94 = vmatpush.bf16.msra.mxu0 0
    %95 = vmatpush.bf16.msra.mxu0 0
    %96 = vmatpush.bf16.msra.mxu0 %v62
    %97 = vmatpush.bf16.msra.mxu0 %v61
    %98 = vmatmul.bf16.gmra.mxu0 %v67
    %v99 = vpop.f32.mrf.mxu0
    %v100 = vadd.f32 0.0, %v99
    %v101 = vpop.f32.mrf.mxu0
    %v102 = vadd.f32 0.0, %v101
    %103 = vmatmul.bf16.gmra.mxu0 %v70
    %v104 = vpop.f32.mrf.mxu0
    %v105 = vadd.f32 0.0, %v104
    %v106 = vpop.f32.mrf.mxu0
    %v107 = vadd.f32 0.0, %v106
    %108 = vmatmul.bf16.gmra.mxu0 %v73
    %v109 = vpop.f32.mrf.mxu0
    %v110 = vadd.f32 0.0, %v109
    %v111 = vpop.f32.mrf.mxu0
    %v112 = vadd.f32 0.0, %v111
    %113 = vmatmul.bf16.gmra.mxu0 %v76
    %v114 = vpop.f32.mrf.mxu0
    %v115 = vadd.f32 0.0, %v114
    %v116 = vpop.f32.mrf.mxu0
    %v117 = vadd.f32 0.0, %v116
    %118 = vmatmul.bf16.gmra.mxu0 %v79
    %v119 = vpop.f32.mrf.mxu0
    %v120 = vadd.f32 0.0, %v119
    %v121 = vpop.f32.mrf.mxu0
    %v122 = vadd.f32 0.0, %v121
    %123 = vmatmul.bf16.gmra.mxu0 %v82
    %v124 = vpop.f32.mrf.mxu0
    %v125 = vadd.f32 0.0, %v124
    %v126 = vpop.f32.mrf.mxu0
    %v127 = vadd.f32 0.0, %v126
    %128 = vmatmul.bf16.gmra.mxu0 %v85
    %v129 = vpop.f32.mrf.mxu0
    %v130 = vadd.f32 0.0, %v129
    %v131 = vpop.f32.mrf.mxu0
    %v132 = vadd.f32 0.0, %v131
    %133 = vmatmul.bf16.gmra.mxu0 %v88
    %v134 = vpop.f32.mrf.mxu0
    %v135 = vadd.f32 0.0, %v134
    %v136 = vpop.f32.mrf.mxu0
    %v137 = vadd.f32 0.0, %v136
    %138 = vdwg.mxu0
    %v139 = vadd.f32 %v100, %v102
    %v140 = vadd.f32 %v139, %v105
    %v141 = vadd.f32 %v140, %v107
    %v142 = vadd.f32 %v141, %v110
    %v143 = vadd.f32 %v142, %v112
    %v144 = vadd.f32 %v143, %v115
    %v145 = vadd.f32 %v144, %v117
    %v146 = vadd.f32 %v145, %v120
    %v147 = vadd.f32 %v146, %v122
    %v148 = vadd.f32 %v147, %v125
    %v149 = vadd.f32 %v148, %v127
    %v150 = vadd.f32 %v149, %v130
    %v151 = vadd.f32 %v150, %v132
    %v152 = vadd.f32 %v151, %v135
    %v153 = vadd.f32 %v152, %v137
    %v154 = vrot.slane %v153, 4
    %v155 = vadd.f32 %v153, %v154
    %v156 = vrot.slane %v155, 2
    %v157 = vadd.f32 %v155, %v156
    %v158 = vrot.slane %v157, 1
    %v159 = vadd.f32 %v157, %v158
    %v160 = vrcp.pop 128.0
    %v161 = vmul.f32 128.0, %v160
    %v162 = vsub.f32 1.0, %v161
    %v163 = vmul.f32 %v160, %v162
    %v164 = vadd.f32 %v160, %v163
    %vm165 = vweird.f32 %v160
    %v166 = vsel %vm165, %v160, %v164
    %v167 = vmul.f32 %v159, %v166
    %v168 = vsub.f32 %v100, %v167
    %v169 = vsub.f32 %v102, %v167
    %v170 = vsub.f32 %v105, %v167
    %v171 = vsub.f32 %v107, %v167
    %v172 = vsub.f32 %v110, %v167
    %v173 = vsub.f32 %v112, %v167
    %v174 = vsub.f32 %v115, %v167
    %v175 = vsub.f32 %v117, %v167
    %v176 = vsub.f32 %v120, %v167
    %v177 = vsub.f32 %v122, %v167
    %v178 = vsub.f32 %v125, %v167
    %v179 = vsub.f32 %v127, %v167
    %v180 = vsub.f32 %v130, %v167
    %v181 = vsub.f32 %v132, %v167
    %v182 = vsub.f32 %v135, %v167
    %v183 = vsub.f32 %v137, %v167
    %v184 = vmul.f32 %v168, %v168
    %v185 = vmul.f32 %v169, %v169
    %v186 = vmul.f32 %v170, %v170
    %v187 = vmul.f32 %v171, %v171
    %v188 = vmul.f32 %v172, %v172
    %v189 = vmul.f32 %v173, %v173
    %v190 = vmul.f32 %v174, %v174
    %v191 = vmul.f32 %v175, %v175
    %v192 = vmul.f32 %v176, %v176
    %v193 = vmul.f32 %v177, %v177
    %v194 = vmul.f32 %v178, %v178
    %v195 = vmul.f32 %v179, %v179
    %v196 = vmul.f32 %v180, %v180
    %v197 = vmul.f32 %v181, %v181
    %v198 = vmul.f32 %v182, %v182
    %v199 = vmul.f32 %v183, %v183
    %v200 = vadd.f32 %v184, %v185
    %v201 = vadd.f32 %v200, %v186
    %v202 = vadd.f32 %v201, %v187
    %v203 = vadd.f32 %v202, %v188
    %v204 = vadd.f32 %v203, %v189
    %v205 = vadd.f32 %v204, %v190
    %v206 = vadd.f32 %v205, %v191
    %v207 = vadd.f32 %v206, %v192
    %v208 = vadd.f32 %v207, %v193
    %v209 = vadd.f32 %v208, %v194
    %v210 = vadd.f32 %v209, %v195
    %v211 = vadd.f32 %v210, %v196
    %v212 = vadd.f32 %v211, %v197
    %v213 = vadd.f32 %v212, %v198
    %v214 = vadd.f32 %v213, %v199
    %v215 = vrot.slane %v214, 4
    %v216 = vadd.f32 %v214, %v215
    %v217 = vrot.slane %v216, 2
    %v218 = vadd.f32 %v216, %v217
    %v219 = vrot.slane %v218, 1
    %v220 = vadd.f32 %v218, %v219
    %v221 = vmul.f32 %v220, %v166
    %v222 = vld [vmem:[%s2] sm:$0x1]
    %v223 = vadd.f32 %v221, 1e-05
    %v224 = vrsqrt.pop %v223
    %v225 = vmul.f32 %v224, %v223
    %v226 = vmul.f32 %v225, %v224
    %v227 = vmul.f32 0.5, %v226
    %v228 = vsub.f32 1.5, %v227
    %v229 = vmul.f32 %v224, %v228
    %vm230 = vweird.f32 %v223
    %vm231 = vweird.f32 %v224
    %vm232 = vmor %vm230, %vm231
    %v233 = vsel %vm232, %v224, %v229
    %v234 = vmul.f32 %v222, %v233
    %v235 = vld [vmem:[%s3] sm:$0x1]
    %v236 = vmul.f32 %v167, %v234
    %v237 = vsub.f32 %v235, %v236
    %v239 = vperm.slane %v234, 0
    %v241 = vmul.f32 %v100, %v239
    %v242 = vmul.f32 %v102, %v239
    %v243 = vmul.f32 %v105, %v239
    %v244 = vmul.f32 %v107, %v239
    %v245 = vmul.f32 %v110, %v239
    %v246 = vmul.f32 %v112, %v239
    %v247 = vmul.f32 %v115, %v239
    %v248 = vmul.f32 %v117, %v239
    %v249 = vmul.f32 %v120, %v239
    %v250 = vmul.f32 %v122, %v239
    %v251 = vmul.f32 %v125, %v239
    %v252 = vmul.f32 %v127, %v239
    %v253 = vmul.f32 %v130, %v239
    %v254 = vmul.f32 %v132, %v239
    %v255 = vmul.f32 %v135, %v239
    %v256 = vmul.f32 %v137, %v239
    %v258 = vperm.slane %v237, 0
    %v260 = vadd.f32 %v241, %v258
    %v261 = vadd.f32 %v242, %v258
    %v262 = vadd.f32 %v243, %v258
    %v263 = vadd.f32 %v244, %v258
    %v264 = vadd.f32 %v245, %v258
    %v265 = vadd.f32 %v246, %v258
    %v266 = vadd.f32 %v247, %v258
    %v267 = vadd.f32 %v248, %v258
    %v268 = vadd.f32 %v249, %v258
    %v269 = vadd.f32 %v250, %v258
    %v270 = vadd.f32 %v251, %v258
    %v271 = vadd.f32 %v252, %v258
    %v272 = vadd.f32 %v253, %v258
    %v273 = vadd.f32 %v254, %v258
    %v274 = vadd.f32 %v255, %v258
    %v275 = vadd.f32 %v256, %v258
    %v276 = vmax.f32 %v260, 0.0
    %v277 = vmax.f32 %v261, 0.0
    %v278 = vmax.f32 %v262, 0.0
    %v279 = vmax.f32 %v263, 0.0
    %v280 = vmax.f32 %v264, 0.0
    %v281 = vmax.f32 %v265, 0.0
    %v282 = vmax.f32 %v266, 0.0
    %v283 = vmax.f32 %v267, 0.0
    %v284 = vmax.f32 %v268, 0.0
    %v285 = vmax.f32 %v269, 0.0
    %v286 = vmax.f32 %v270, 0.0
    %v287 = vmax.f32 %v271, 0.0
    %v288 = vmax.f32 %v272, 0.0
    %v289 = vmax.f32 %v273, 0.0
    %v290 = vmax.f32 %v274, 0.0
    %v291 = vmax.f32 %v275, 0.0
    %v292 = vpack.c.bf16 %v277, %v276
    %v293 = vpack.c.bf16 %v279, %v278
    %v294 = vpack.c.bf16 %v281, %v280
    %v295 = vpack.c.bf16 %v283, %v282
    %v296 = vpack.c.bf16 %v285, %v284
    %v297 = vpack.c.bf16 %v287, %v286
    %v298 = vpack.c.bf16 %v289, %v288
    %v299 = vpack.c.bf16 %v291, %v290
    %v300 = vld [vmem:[%s4] sm:$0xf]
    %v301 = vld [vmem:[%s4 + $0x4] sm:$0xf]
    %v302 = vld [vmem:[%s4 + $0x8] sm:$0xf]
    %v303 = vld [vmem:[%s4 + $0xc] sm:$0xf]
    %v304 = vld [vmem:[%s4 + $0x10] sm:$0xf]
    %v305 = vld [vmem:[%s4 + $0x14] sm:$0xf]
    %v306 = vld [vmem:[%s4 + $0x18] sm:$0xf]
    %v307 = vld [vmem:[%s4 + $0x1c] sm:$0xf]
    %v308 = vld [vmem:[%s4 + $0x20] sm:$0xf]
    %v309 = vld [vmem:[%s4 + $0x24] sm:$0xf]
    %v310 = vld [vmem:[%s4 + $0x28] sm:$0xf]
    %v311 = vld [vmem:[%s4 + $0x2c] sm:$0xf]
    %v312 = vld [vmem:[%s4 + $0x30] sm:$0xf]
    %v313 = vld [vmem:[%s4 + $0x34] sm:$0xf]
    %v314 = vld [vmem:[%s4 + $0x38] sm:$0xf]
    %v315 = vld [vmem:[%s4 + $0x3c] sm:$0xf]
    %v316 = vld [vmem:[%s5] sm:$0x1]
    %v318 = vperm.slane %v316, 0
    %v336 = vunpack.c.l.b16 %v300
    %v337 = vunpack.c.l.b16 %v301
    %v338 = vunpack.c.l.b16 %v302
    %v339 = vunpack.c.l.b16 %v303
    %v340 = vunpack.c.l.b16 %v304
    %v341 = vunpack.c.l.b16 %v305
    %v342 = vunpack.c.l.b16 %v306
    %v343 = vunpack.c.l.b16 %v307
    %v344 = vunpack.c.l.b16 %v308
    %v345 = vunpack.c.l.b16 %v309
    %v346 = vunpack.c.l.b16 %v310
    %v347 = vunpack.c.l.b16 %v311
    %v348 = vunpack.c.l.b16 %v312
    %v349 = vunpack.c.l.b16 %v313
    %v350 = vunpack.c.l.b16 %v314
    %v351 = vunpack.c.l.b16 %v315
    %v352 = vpack.c.b16 %v337, %v336
    %v353 = vpack.c.b16 %v339, %v338
    %v354 = vpack.c.b16 %v341, %v340
    %v355 = vpack.c.b16 %v343, %v342
    %v356 = vpack.c.b16 %v345, %v344
    %v357 = vpack.c.b16 %v347, %v346
    %v358 = vpack.c.b16 %v349, %v348
    %v359 = vpack.c.b16 %v351, %v350
    %368 = vmatpush.bf16.msra.mxu0 %v359
    %369 = vmatpush.bf16.msra.mxu0 %v358
    %370 = vmatpush.bf16.msra.mxu0 %v357
    %371 = vmatpush.bf16.msra.mxu0 %v356
    %372 = vmatpush.bf16.msra.mxu0 %v355
    %373 = vmatpush.bf16.msra.mxu0 %v354
    %374 = vmatpush.bf16.msra.mxu0 %v353
    %375 = vmatpush.bf16.msra.mxu0 %v352
    %376 = vmatmul.bf16.gmra.mxu0 %v292
    %v377 = vpop.f32.mrf.mxu0
    %v378 = vadd.f32 %v318, %v377
    %v379 = vpop.f32.mrf.mxu0
    %v380 = vadd.f32 %v318, %v379
    %381 = vmatmul.bf16.gmra.mxu0 %v293
    %v382 = vpop.f32.mrf.mxu0
    %v383 = vadd.f32 %v318, %v382
    %v384 = vpop.f32.mrf.mxu0
    %v385 = vadd.f32 %v318, %v384
    %386 = vmatmul.bf16.gmra.mxu0 %v294
    %v387 = vpop.f32.mrf.mxu0
    %v388 = vadd.f32 %v318, %v387
    %v389 = vpop.f32.mrf.mxu0
    %v390 = vadd.f32 %v318, %v389
    %391 = vmatmul.bf16.gmra.mxu0 %v295
    %v392 = vpop.f32.mrf.mxu0
    %v393 = vadd.f32 %v318, %v392
    %v394 = vpop.f32.mrf.mxu0
    %v395 = vadd.f32 %v318, %v394
    %396 = vmatmul.bf16.gmra.mxu0 %v296
    %v397 = vpop.f32.mrf.mxu0
    %v398 = vadd.f32 %v318, %v397
    %v399 = vpop.f32.mrf.mxu0
    %v400 = vadd.f32 %v318, %v399
    %401 = vmatmul.bf16.gmra.mxu0 %v297
    %v402 = vpop.f32.mrf.mxu0
    %v403 = vadd.f32 %v318, %v402
    %v404 = vpop.f32.mrf.mxu0
    %v405 = vadd.f32 %v318, %v404
    %406 = vmatmul.bf16.gmra.mxu0 %v298
    %v407 = vpop.f32.mrf.mxu0
    %v408 = vadd.f32 %v318, %v407
    %v409 = vpop.f32.mrf.mxu0
    %v410 = vadd.f32 %v318, %v409
    %411 = vmatmul.bf16.gmra.mxu0 %v299
    %v412 = vpop.f32.mrf.mxu0
    %v413 = vadd.f32 %v318, %v412
    %v414 = vpop.f32.mrf.mxu0
    %v415 = vadd.f32 %v318, %v414
    %416 = vdwg.mxu0
    %417 = vst [vmem:[#allocation2] sm:$0xff] %v378
    %418 = vst [vmem:[#allocation2 + $0x8] sm:$0xff] %v380
    %419 = vst [vmem:[#allocation2 + $0x10] sm:$0xff] %v383
    %420 = vst [vmem:[#allocation2 + $0x18] sm:$0xff] %v385
    %421 = vst [vmem:[#allocation2 + $0x20] sm:$0xff] %v388
    %422 = vst [vmem:[#allocation2 + $0x28] sm:$0xff] %v390
    %423 = vst [vmem:[#allocation2 + $0x30] sm:$0xff] %v393
    %424 = vst [vmem:[#allocation2 + $0x38] sm:$0xff] %v395
    %425 = vst [vmem:[#allocation2 + $0x40] sm:$0xff] %v398
    %426 = vst [vmem:[#allocation2 + $0x48] sm:$0xff] %v400
    %427 = vst [vmem:[#allocation2 + $0x50] sm:$0xff] %v403
    %428 = vst [vmem:[#allocation2 + $0x58] sm:$0xff] %v405
    %429 = vst [vmem:[#allocation2 + $0x60] sm:$0xff] %v408
    %430 = vst [vmem:[#allocation2 + $0x68] sm:$0xff] %v410
    %431 = vst [vmem:[#allocation2 + $0x70] sm:$0xff] %v413
    %432 = vst [vmem:[#allocation2 + $0x78] sm:$0xff] %v415
    // Predicated region
    $region26: #{tpu_custom_call.1} parent=1 // pred_check
      _
    $region27: #{tpu_custom_call.1} parent=1 // pred_check_branch
      %434 = sbr.rel (0) target = $region29
    $region28: #{tpu_custom_call.1} parent=1 // pred_region
      %436 = vsyncadd [#allocation3], 0
      %s437 = sshll.u32 [#allocation2], 4
      %s438 = int_to_ptr.vmem [resolvable:$true] %s437
      %s439 = sshll.u32 %s6, 4
      %s440 = int_to_ptr.hbm [resolvable:$true] %s439
      %445 = dma.vmem_to_hbm [thread:$0]  %s438, 2048, %s440, [#allocation3], 128, 128, 8
    $region29: #{tpu_custom_call.1} parent=1 // pred_fallthru
      _
    // Predicated region
    $region30: #{tpu_custom_call.1} parent=1 // pred_check
      _
    $region31: #{tpu_custom_call.1} parent=1 // pred_check_branch
      %447 = sbr.rel (0) target = $region33
    $region32: #{tpu_custom_call.1} parent=1 // pred_region
      %449 = dma.done [#allocation3], 2048
    $region33: #{tpu_custom_call.1} parent=1 // pred_fallthru
      _
    %450 = vsyncpa [#allocation3], 1

</llo_original>
